<compile_context>
chip_gen: v5e
topology: v5e:2x2
jax: 0.10.0
libtpu: 0.0.40
codegen_flags: <defaults>
</compile_context>

<pallas_src>
import functools

import jax
import jax.numpy as jnp
from jax.experimental import pallas as pl
from jax.experimental.pallas import tpu as pltpu


# --------------------------------------------------------------------------
# Pallas kernel
# --------------------------------------------------------------------------
def _double_conv_kernel(xf_ref, wt1_ref, wt2_ref, gb_ref, pool_ref, o_ref,
                        h1pad_ref, *, N, H, W, C2):
    """Fused DoubleConv on lane-dense, W-folded layouts.

    xf_ref   : (N, H+2, W*C1) f32   H-zero-padded input, (W, C) folded on lanes
    wt1_ref  : (3, W*C1, W*C2) bf16 per-dy banded (Toeplitz-in-dx) conv1 weight
    wt2_ref  : (3, W*C2, W*C2) bf16 per-dy banded conv2 weight
    gb_ref   : (8, W*C2) f32        rows 0..3 = gamma1, beta1, gamma2, beta2
    pool_ref : (W*C2, W*C2) f32     0/1 matrix summing columns of equal channel
    o_ref    : (N*H, W*C2) f32      lane-dense output
    h1pad_ref: (N, H+2, W*C2) f32   VMEM scratch staging the intermediate
    """
    eps = 1e-5
    inv_cnt = 1.0 / (N * H * W)          # BN stats reduce over all of N, H, W
    S = W * C2
    pool = pool_ref[...]

    def conv_bn_relu(inp_ref, wt_ref, g, be):
        # 3x3 conv as three accumulating bf16 MXU matmuls (one per dy); the
        # dx band (and the W zero-padding) is baked into the banded weight.
        kin = inp_ref.shape[-1]
        acc = jnp.zeros((N * H, S), jnp.float32)
        for dy in range(3):                               # static, unrolled
            x_dy = (inp_ref[:, dy:dy + H, :]
                    .reshape(N * H, kin).astype(jnp.bfloat16))
            acc = acc + jnp.dot(x_dy, wt_ref[dy],
                                preferred_element_type=jnp.float32)

        # BatchNorm with batch statistics: ONE pooling matmul on stacked
        # [row-sum ; row-sum-of-squares]; both reductions start as soon as
        # `acc` lands (no acc -> mean -> (acc-mean) -> var serial chain).
        # NOTE: the conv bias is never added -- it cancels exactly under
        # training-mode (batch-statistics) BatchNorm.  Do NOT reuse this
        # kernel with eval-mode running stats.
        stats = jnp.concatenate(
            [jnp.sum(acc, axis=0, keepdims=True),
             jnp.sum(acc * acc, axis=0, keepdims=True)], axis=0)   # (2, S)
        pooled = jnp.dot(stats, pool, preferred_element_type=jnp.float32)
        mean = pooled[0:1, :] * inv_cnt
        var = pooled[1:2, :] * inv_cnt - mean * mean
        scale = g * jax.lax.rsqrt(var + eps)
        return jnp.maximum((acc - mean) * scale + be, 0.0)         # fused ReLU

    g1, be1 = gb_ref[0:1, :], gb_ref[1:2, :]
    g2, be2 = gb_ref[2:3, :], gb_ref[3:4, :]

    h1 = conv_bn_relu(xf_ref, wt1_ref, g1, be1)                    # (N*H, S)

    # Stage the intermediate in a zero-bordered VMEM scratch: zero the two
    # H-halo rows, write the interior once (lane-aligned sublane-offset store).
    zrow = jnp.zeros((N, 1, S), jnp.float32)
    h1pad_ref[:, 0:1, :] = zrow
    h1pad_ref[:, H + 1:H + 2, :] = zrow
    h1pad_ref[:, 1:H + 1, :] = h1.reshape(N, H, S)

    h2 = conv_bn_relu(h1pad_ref, wt2_ref, g2, be2)
    o_ref[...] = h2.astype(o_ref.dtype)                            # (N*H, S)


# --------------------------------------------------------------------------
# One-time parameter/layout prep (hoisted OUT of the per-call jit)
# --------------------------------------------------------------------------
def _toeplitz_weight(w_hwio, W):
    """HWIO (3, 3, Cin, Cout) -> (3, W*Cin, W*Cout) per-dy banded weights.

    Wt[dy, p*Cin + ci, j*Cout + co] = w[dy, p - j + 1, ci, co] when
    0 <= p - j + 1 <= 2, else 0.  The band encodes both the dx offsets and the
    implicit zero-padding of the W axis (padding=1 conv), so the activations
    never need W padding.
    """
    kH, kW, Cin, Cout = w_hwio.shape
    p = jnp.arange(W)[:, None]
    j = jnp.arange(W)[None, :]
    dx = p - j + 1
    valid = (dx >= 0) & (dx < kW)
    wt = jnp.take(w_hwio, jnp.clip(dx, 0, kW - 1), axis=1)  # (kH, W, W, Cin, Cout)
    wt = jnp.where(valid[None, :, :, None, None], wt, 0.0)
    wt = jnp.transpose(wt, (0, 1, 3, 2, 4))                 # (kH, W, Cin, W, Cout)
    return wt.reshape(kH, W * Cin, W * Cout).astype(jnp.bfloat16)


def _channel_pool_matrix(W, C):
    """0/1 matrix P with P[s, s'] = 1 iff columns s, s' hold the same channel."""
    s = jnp.arange(W * C)
    return (s[:, None] % C == s[None, :] % C).astype(jnp.float32)


def prepare_double_conv(params, W):
    """Build banded weights / pool matrix / merged gamma-beta once per params."""
    C2 = params["w1"].shape[-1]
    S = W * C2
    gb = jnp.zeros((8, S), jnp.float32)                     # pad to 8 sublanes
    gb = gb.at[0].set(jnp.tile(params["g1"], W))
    gb = gb.at[1].set(jnp.tile(params["be1"], W))
    gb = gb.at[2].set(jnp.tile(params["g2"], W))
    gb = gb.at[3].set(jnp.tile(params["be2"], W))
    # Note: conv biases b1/b2 are intentionally NOT used -- they cancel
    # exactly under training-mode (batch-statistics) BatchNorm.
    return {
        "wt1": _toeplitz_weight(params["w1"], W),
        "wt2": _toeplitz_weight(params["w2"], W),
        "gb": gb,
        "pool": _channel_pool_matrix(W, C2),
    }


# --------------------------------------------------------------------------
# Forward wrapper
# --------------------------------------------------------------------------
@jax.jit
def _double_conv_fwd(x_nchw, wt1, wt2, gb, pool):
    N, C1, H, W = x_nchw.shape
    S = gb.shape[1]
    C2 = S // W

    # NCHW -> NHWC -> zero-pad H only -> fold (W, C) onto the lane axis.
    x = jnp.transpose(x_nchw, (0, 2, 3, 1))
    xp = jnp.pad(x, ((0, 0), (1, 1), (0, 0), (0, 0)))
    xf = xp.reshape(N, H + 2, W * C1)

    kernel = functools.partial(_double_conv_kernel, N=N, H=H, W=W, C2=C2)

    flops = (2 * (N * H) * (3 * W * C1) * S        # conv1 matmuls
             + 2 * (N * H) * (3 * W * C2) * S      # conv2 matmuls
             + 2 * 2 * 2 * S * S)                  # BN pooling matmuls
    bytes_accessed = (4 * xf.size + 2 * (wt1.size + wt2.size)
                      + 4 * (gb.size + pool.size) + 4 * N * H * S)

    # TODO(synk): before reusing at production UNet sizes (or on v7x with its
    # 64 MiB VMEM / 2 TensorCores), split rows across a parallel grid axis
    # with a two-pass BN and replace the banded Toeplitz weight -- its
    # (W+2)/3x FLOP/byte blowup is only acceptable while the kernel is
    # overhead-bound at toy sizes.
    out = pl.pallas_call(
        kernel,
        out_shape=jax.ShapeDtypeStruct((N * H, S), jnp.float32),
        grid=(1,),
        in_specs=[
            pl.BlockSpec((N, H + 2, W * C1), lambda i: (0, 0, 0)),
            pl.BlockSpec(wt1.shape, lambda i: (0, 0, 0)),
            pl.BlockSpec(wt2.shape, lambda i: (0, 0, 0)),
            pl.BlockSpec((8, S), lambda i: (0, 0)),
            pl.BlockSpec((S, S), lambda i: (0, 0)),
        ],
        out_specs=pl.BlockSpec((N * H, S), lambda i: (0, 0)),
        scratch_shapes=[pltpu.VMEM((N, H + 2, S), jnp.float32)],
        compiler_params=pltpu.CompilerParams(
            dimension_semantics=("arbitrary",),
            vmem_limit_bytes=32 * 1024 * 1024),
        cost_estimate=pl.CostEstimate(
            flops=flops, transcendentals=2 * S, bytes_accessed=bytes_accessed),
    )(xf, wt1, wt2, gb, pool)

    out = out.reshape(N, H, W, C2)                 # unfold lanes
    return jnp.transpose(out, (0, 3, 1, 2))        # NHWC -> NCHW


def double_conv(x_nchw, prepped):
    """DoubleConv.forward. Input NCHW (PyTorch convention), output NCHW."""
    return _double_conv_fwd(x_nchw, prepped["wt1"], prepped["wt2"],
                            prepped["gb"], prepped["pool"])


# ---------------- pure-JAX reference (for correctness check) ----------------
def _ref_block(x_nhwc, w, b, gamma, beta):
    y = jax.lax.conv_general_dilated(
        x_nhwc, w, window_strides=(1, 1), padding="SAME",
        dimension_numbers=("NHWC", "HWIO", "NHWC")) + b
    mean = y.mean(axis=(0, 1, 2), keepdims=True)
    var = ((y - mean) ** 2).mean(axis=(0, 1, 2), keepdims=True)
    return jnp.maximum(gamma * (y - mean) / jnp.sqrt(var + 1e-5) + beta, 0.0)


def _ref_double_conv(x_nchw, p):
    x = jnp.transpose(x_nchw, (0, 2, 3, 1))
    x = _ref_block(x, p["w1"], p["b1"], p["g1"], p["be1"])
    x = _ref_block(x, p["w2"], p["b2"], p["g2"], p["be2"])
    return jnp.transpose(x, (0, 3, 1, 2))


if __name__ == "__main__":
    in_ch, out_ch = 4, 8
    N, H, W = 2, 16, 16

    key = jax.random.PRNGKey(0)
    kx, k1, k2, k3, k4, k5, k6, k7, k8 = jax.random.split(key, 9)

    x = jax.random.normal(kx, (N, in_ch, H, W), dtype=jnp.float32)  # NCHW

    params = {
        # conv weights stored HWIO: (kH, kW, Cin, Cout)
        "w1": 0.1 * jax.random.normal(k1, (3, 3, in_ch, out_ch), jnp.float32),
        "b1": 0.1 * jax.random.normal(k2, (out_ch,), jnp.float32),
        "g1": 1.0 + 0.1 * jax.random.normal(k3, (out_ch,), jnp.float32),
        "be1": 0.1 * jax.random.normal(k4, (out_ch,), jnp.float32),
        "w2": 0.1 * jax.random.normal(k5, (3, 3, out_ch, out_ch), jnp.float32),
        "b2": 0.1 * jax.random.normal(k6, (out_ch,), jnp.float32),
        "g2": 1.0 + 0.1 * jax.random.normal(k7, (out_ch,), jnp.float32),
        "be2": 0.1 * jax.random.normal(k8, (out_ch,), jnp.float32),
    }

    prepped = prepare_double_conv(params, W)   # one-time layout prep
    out = double_conv(x, prepped)
    out = jax.block_until_ready(out)

    ref = _ref_double_conv(x, params)
    assert out.shape == (N, out_ch, H, W), out.shape
    err = float(jnp.max(jnp.abs(out - ref)))
    # bf16 MXU operands (f32 accumulation + f32 BN) -> loosened tolerance.
    assert jnp.allclose(out, ref, atol=5e-2, rtol=5e-2), err

    print("KERNEL_OK")
</pallas_src>

<mosaic_0001>
module attributes {stable_mosaic.version = 11 : i64} {
  func.func @_double_conv_kernel(%arg0: i32, %arg1: memref<2x18x64xf32, #tpu.memory_space<vmem>>, %arg2: memref<3x64x128xbf16, #tpu.memory_space<vmem>>, %arg3: memref<3x128x128xbf16, #tpu.memory_space<vmem>>, %arg4: memref<8x128xf32, #tpu.memory_space<vmem>>, %arg5: memref<128x128xf32, #tpu.memory_space<vmem>>, %arg6: memref<32x128xf32, #tpu.memory_space<vmem>>, %arg7: memref<2x18x128xf32, #tpu.memory_space<vmem>>) attributes {dimension_semantics = [#tpu.dimension_semantics<arbitrary>], iteration_bounds = array<i64: 1>, scalar_prefetch = 0 : i64, scratch_operands = 1 : i64, tpu.core_type = #tpu.core_type<tc>, window_params = [{pipeline_mode = #tpu.pipeline_mode<synchronous>, transform_indices = @transform_0, window_bounds = array<i64: 2, 18, 64>}, {pipeline_mode = #tpu.pipeline_mode<synchronous>, transform_indices = @transform_1, window_bounds = array<i64: 3, 64, 128>}, {pipeline_mode = #tpu.pipeline_mode<synchronous>, transform_indices = @transform_2, window_bounds = array<i64: 3, 128, 128>}, {pipeline_mode = #tpu.pipeline_mode<synchronous>, transform_indices = @transform_3, window_bounds = array<i64: 8, 128>}, {pipeline_mode = #tpu.pipeline_mode<synchronous>, transform_indices = @transform_4, window_bounds = array<i64: 128, 128>}, {pipeline_mode = #tpu.pipeline_mode<synchronous>, transform_indices = @transform_5, window_bounds = array<i64: 32, 128>}]} {
    %c0 = arith.constant 0 : index
    %c0_0 = arith.constant 0 : index
    %0 = vector.load %arg5[%c0, %c0_0] : memref<128x128xf32, #tpu.memory_space<vmem>>, vector<128x128xf32>
    %c0_1 = arith.constant 0 : index
    %c0_2 = arith.constant 0 : index
    %1 = vector.load %arg4[%c0_1, %c0_2] : memref<8x128xf32, #tpu.memory_space<vmem>>, vector<1x128xf32>
    %c1 = arith.constant 1 : index
    %c0_3 = arith.constant 0 : index
    %2 = vector.load %arg4[%c1, %c0_3] : memref<8x128xf32, #tpu.memory_space<vmem>>, vector<1x128xf32>
    %c2 = arith.constant 2 : index
    %c0_4 = arith.constant 0 : index
    %3 = vector.load %arg4[%c2, %c0_4] : memref<8x128xf32, #tpu.memory_space<vmem>>, vector<1x128xf32>
    %c3 = arith.constant 3 : index
    %c0_5 = arith.constant 0 : index
    %4 = vector.load %arg4[%c3, %c0_5] : memref<8x128xf32, #tpu.memory_space<vmem>>, vector<1x128xf32>
    %cst = arith.constant 0.000000e+00 : f32
    %5 = vector.broadcast %cst : f32 to vector<32x128xf32>
    %c0_6 = arith.constant 0 : index
    %c0_7 = arith.constant 0 : index
    %c0_8 = arith.constant 0 : index
    %6 = vector.load %arg1[%c0_6, %c0_7, %c0_8] : memref<2x18x64xf32, #tpu.memory_space<vmem>>, vector<2x16x64xf32>
    %7 = vector.shape_cast %6 : vector<2x16x64xf32> to vector<32x64xf32>
    %8 = arith.truncf %7 : vector<32x64xf32> to vector<32x64xbf16>
    %c0_9 = arith.constant 0 : index
    %c0_10 = arith.constant 0 : index
    %c0_11 = arith.constant 0 : index
    %9 = vector.load %arg2[%c0_9, %c0_10, %c0_11] : memref<3x64x128xbf16, #tpu.memory_space<vmem>>, vector<1x64x128xbf16>
    %10 = vector.shape_cast %9 : vector<1x64x128xbf16> to vector<64x128xbf16>
    %cst_12 = arith.constant dense<0.000000e+00> : vector<32x128xf32>
    %11 = tpu.matmul %8, %10, %cst_12 {dimension_numbers = #tpu.dot_dimension_numbers<[1], [0], [0], [1], [0, 0, 1, 1], [], []>} : vector<32x64xbf16>, vector<64x128xbf16>, vector<32x128xf32> -> vector<32x128xf32>
    %12 = arith.addf %5, %11 : vector<32x128xf32>
    %c0_13 = arith.constant 0 : index
    %c1_14 = arith.constant 1 : index
    %c0_15 = arith.constant 0 : index
    %13 = vector.load %arg1[%c0_13, %c1_14, %c0_15] : memref<2x18x64xf32, #tpu.memory_space<vmem>>, vector<2x16x64xf32>
    %14 = vector.shape_cast %13 : vector<2x16x64xf32> to vector<32x64xf32>
    %15 = arith.truncf %14 : vector<32x64xf32> to vector<32x64xbf16>
    %c1_16 = arith.constant 1 : index
    %c0_17 = arith.constant 0 : index
    %c0_18 = arith.constant 0 : index
    %16 = vector.load %arg2[%c1_16, %c0_17, %c0_18] : memref<3x64x128xbf16, #tpu.memory_space<vmem>>, vector<1x64x128xbf16>
    %17 = vector.shape_cast %16 : vector<1x64x128xbf16> to vector<64x128xbf16>
    %cst_19 = arith.constant dense<0.000000e+00> : vector<32x128xf32>
    %18 = tpu.matmul %15, %17, %cst_19 {dimension_numbers = #tpu.dot_dimension_numbers<[1], [0], [0], [1], [0, 0, 1, 1], [], []>} : vector<32x64xbf16>, vector<64x128xbf16>, vector<32x128xf32> -> vector<32x128xf32>
    %19 = arith.addf %12, %18 : vector<32x128xf32>
    %c0_20 = arith.constant 0 : index
    %c2_21 = arith.constant 2 : index
    %c0_22 = arith.constant 0 : index
    %20 = vector.load %arg1[%c0_20, %c2_21, %c0_22] : memref<2x18x64xf32, #tpu.memory_space<vmem>>, vector<2x16x64xf32>
    %21 = vector.shape_cast %20 : vector<2x16x64xf32> to vector<32x64xf32>
    %22 = arith.truncf %21 : vector<32x64xf32> to vector<32x64xbf16>
    %c2_23 = arith.constant 2 : index
    %c0_24 = arith.constant 0 : index
    %c0_25 = arith.constant 0 : index
    %23 = vector.load %arg2[%c2_23, %c0_24, %c0_25] : memref<3x64x128xbf16, #tpu.memory_space<vmem>>, vector<1x64x128xbf16>
    %24 = vector.shape_cast %23 : vector<1x64x128xbf16> to vector<64x128xbf16>
    %cst_26 = arith.constant dense<0.000000e+00> : vector<32x128xf32>
    %25 = tpu.matmul %22, %24, %cst_26 {dimension_numbers = #tpu.dot_dimension_numbers<[1], [0], [0], [1], [0, 0, 1, 1], [], []>} : vector<32x64xbf16>, vector<64x128xbf16>, vector<32x128xf32> -> vector<32x128xf32>
    %26 = arith.addf %19, %25 : vector<32x128xf32>
    %cst_27 = arith.constant dense<0.000000e+00> : vector<128xf32>
    %27 = vector.multi_reduction <add>, %26, %cst_27 [0] : vector<32x128xf32> to vector<128xf32>
    %28 = vector.shape_cast %27 : vector<128xf32> to vector<1x128xf32>
    %29 = arith.mulf %26, %26 : vector<32x128xf32>
    %cst_28 = arith.constant dense<0.000000e+00> : vector<128xf32>
    %30 = vector.multi_reduction <add>, %29, %cst_28 [0] : vector<32x128xf32> to vector<128xf32>
    %31 = vector.shape_cast %30 : vector<128xf32> to vector<1x128xf32>
    %32 = tpu.concatenate %28, %31 in 0 : vector<1x128xf32>, vector<1x128xf32> -> vector<2x128xf32>
    %cst_29 = arith.constant dense<0.000000e+00> : vector<2x128xf32>
    %33 = tpu.matmul %32, %0, %cst_29 {dimension_numbers = #tpu.dot_dimension_numbers<[1], [0], [0], [1], [0, 0, 1, 1], [], []>} : vector<2x128xf32>, vector<128x128xf32>, vector<2x128xf32> -> vector<2x128xf32>
    %34 = vector.extract_strided_slice %33 {offsets = [0, 0], sizes = [1, 128], strides = [1, 1]} : vector<2x128xf32> to vector<1x128xf32>
    %cst_30 = arith.constant 0.001953125 : f32
    %35 = vector.broadcast %cst_30 : f32 to vector<1x128xf32>
    %36 = arith.mulf %34, %35 : vector<1x128xf32>
    %37 = vector.extract_strided_slice %33 {offsets = [1, 0], sizes = [1, 128], strides = [1, 1]} : vector<2x128xf32> to vector<1x128xf32>
    %cst_31 = arith.constant 0.001953125 : f32
    %38 = vector.broadcast %cst_31 : f32 to vector<1x128xf32>
    %39 = arith.mulf %37, %38 : vector<1x128xf32>
    %40 = arith.mulf %36, %36 : vector<1x128xf32>
    %41 = arith.subf %39, %40 : vector<1x128xf32>
    %cst_32 = arith.constant 9.99999974E-6 : f32
    %42 = vector.broadcast %cst_32 : f32 to vector<1x128xf32>
    %43 = arith.addf %41, %42 : vector<1x128xf32>
    %44 = math.rsqrt %43 : vector<1x128xf32>
    %45 = arith.mulf %1, %44 : vector<1x128xf32>
    %46 = vector.broadcast %36 : vector<1x128xf32> to vector<32x128xf32>
    %47 = arith.subf %26, %46 : vector<32x128xf32>
    %48 = vector.broadcast %45 : vector<1x128xf32> to vector<32x128xf32>
    %49 = arith.mulf %47, %48 : vector<32x128xf32>
    %50 = vector.broadcast %2 : vector<1x128xf32> to vector<32x128xf32>
    %51 = arith.addf %49, %50 : vector<32x128xf32>
    %cst_33 = arith.constant 0.000000e+00 : f32
    %52 = vector.broadcast %cst_33 : f32 to vector<32x128xf32>
    %53 = arith.maximumf %51, %52 : vector<32x128xf32>
    %cst_34 = arith.constant 0.000000e+00 : f32
    %54 = vector.broadcast %cst_34 : f32 to vector<2x1x128xf32>
    %c0_35 = arith.constant 0 : index
    %c0_36 = arith.constant 0 : index
    %c0_37 = arith.constant 0 : index
    %55 = vector.load %arg7[%c0_35, %c0_36, %c0_37] : memref<2x18x128xf32, #tpu.memory_space<vmem>>, vector<2x1x128xf32>
    tpu.vector_store %arg7[%c0_35, %c0_36, %c0_37], %54 {strides = array<i32>} : memref<2x18x128xf32, #tpu.memory_space<vmem>>, vector<2x1x128xf32>,
    %c0_38 = arith.constant 0 : index
    %c17 = arith.constant 17 : index
    %c0_39 = arith.constant 0 : index
    %56 = vector.load %arg7[%c0_38, %c17, %c0_39] : memref<2x18x128xf32, #tpu.memory_space<vmem>>, vector<2x1x128xf32>
    tpu.vector_store %arg7[%c0_38, %c17, %c0_39], %54 {strides = array<i32>} : memref<2x18x128xf32, #tpu.memory_space<vmem>>, vector<2x1x128xf32>,
    %57 = vector.shape_cast %53 : vector<32x128xf32> to vector<2x16x128xf32>
    %c0_40 = arith.constant 0 : index
    %c1_41 = arith.constant 1 : index
    %c0_42 = arith.constant 0 : index
    %58 = vector.load %arg7[%c0_40, %c1_41, %c0_42] : memref<2x18x128xf32, #tpu.memory_space<vmem>>, vector<2x16x128xf32>
    tpu.vector_store %arg7[%c0_40, %c1_41, %c0_42], %57 {strides = array<i32>} : memref<2x18x128xf32, #tpu.memory_space<vmem>>, vector<2x16x128xf32>,
    %cst_43 = arith.constant 0.000000e+00 : f32
    %59 = vector.broadcast %cst_43 : f32 to vector<32x128xf32>
    %c0_44 = arith.constant 0 : index
    %c0_45 = arith.constant 0 : index
    %c0_46 = arith.constant 0 : index
    %60 = vector.load %arg7[%c0_44, %c0_45, %c0_46] : memref<2x18x128xf32, #tpu.memory_space<vmem>>, vector<2x16x128xf32>
    %61 = vector.shape_cast %60 : vector<2x16x128xf32> to vector<32x128xf32>
    %62 = arith.truncf %61 : vector<32x128xf32> to vector<32x128xbf16>
    %c0_47 = arith.constant 0 : index
    %c0_48 = arith.constant 0 : index
    %c0_49 = arith.constant 0 : index
    %63 = vector.load %arg3[%c0_47, %c0_48, %c0_49] : memref<3x128x128xbf16, #tpu.memory_space<vmem>>, vector<1x128x128xbf16>
    %64 = vector.shape_cast %63 : vector<1x128x128xbf16> to vector<128x128xbf16>
    %cst_50 = arith.constant dense<0.000000e+00> : vector<32x128xf32>
    %65 = tpu.matmul %62, %64, %cst_50 {dimension_numbers = #tpu.dot_dimension_numbers<[1], [0], [0], [1], [0, 0, 1, 1], [], []>} : vector<32x128xbf16>, vector<128x128xbf16>, vector<32x128xf32> -> vector<32x128xf32>
    %66 = arith.addf %59, %65 : vector<32x128xf32>
    %c0_51 = arith.constant 0 : index
    %c1_52 = arith.constant 1 : index
    %c0_53 = arith.constant 0 : index
    %67 = vector.load %arg7[%c0_51, %c1_52, %c0_53] : memref<2x18x128xf32, #tpu.memory_space<vmem>>, vector<2x16x128xf32>
    %68 = vector.shape_cast %67 : vector<2x16x128xf32> to vector<32x128xf32>
    %69 = arith.truncf %68 : vector<32x128xf32> to vector<32x128xbf16>
    %c1_54 = arith.constant 1 : index
    %c0_55 = arith.constant 0 : index
    %c0_56 = arith.constant 0 : index
    %70 = vector.load %arg3[%c1_54, %c0_55, %c0_56] : memref<3x128x128xbf16, #tpu.memory_space<vmem>>, vector<1x128x128xbf16>
    %71 = vector.shape_cast %70 : vector<1x128x128xbf16> to vector<128x128xbf16>
    %cst_57 = arith.constant dense<0.000000e+00> : vector<32x128xf32>
    %72 = tpu.matmul %69, %71, %cst_57 {dimension_numbers = #tpu.dot_dimension_numbers<[1], [0], [0], [1], [0, 0, 1, 1], [], []>} : vector<32x128xbf16>, vector<128x128xbf16>, vector<32x128xf32> -> vector<32x128xf32>
    %73 = arith.addf %66, %72 : vector<32x128xf32>
    %c0_58 = arith.constant 0 : index
    %c2_59 = arith.constant 2 : index
    %c0_60 = arith.constant 0 : index
    %74 = vector.load %arg7[%c0_58, %c2_59, %c0_60] : memref<2x18x128xf32, #tpu.memory_space<vmem>>, vector<2x16x128xf32>
    %75 = vector.shape_cast %74 : vector<2x16x128xf32> to vector<32x128xf32>
    %76 = arith.truncf %75 : vector<32x128xf32> to vector<32x128xbf16>
    %c2_61 = arith.constant 2 : index
    %c0_62 = arith.constant 0 : index
    %c0_63 = arith.constant 0 : index
    %77 = vector.load %arg3[%c2_61, %c0_62, %c0_63] : memref<3x128x128xbf16, #tpu.memory_space<vmem>>, vector<1x128x128xbf16>
    %78 = vector.shape_cast %77 : vector<1x128x128xbf16> to vector<128x128xbf16>
    %cst_64 = arith.constant dense<0.000000e+00> : vector<32x128xf32>
    %79 = tpu.matmul %76, %78, %cst_64 {dimension_numbers = #tpu.dot_dimension_numbers<[1], [0], [0], [1], [0, 0, 1, 1], [], []>} : vector<32x128xbf16>, vector<128x128xbf16>, vector<32x128xf32> -> vector<32x128xf32>
    %80 = arith.addf %73, %79 : vector<32x128xf32>
    %cst_65 = arith.constant dense<0.000000e+00> : vector<128xf32>
    %81 = vector.multi_reduction <add>, %80, %cst_65 [0] : vector<32x128xf32> to vector<128xf32>
    %82 = vector.shape_cast %81 : vector<128xf32> to vector<1x128xf32>
    %83 = arith.mulf %80, %80 : vector<32x128xf32>
    %cst_66 = arith.constant dense<0.000000e+00> : vector<128xf32>
    %84 = vector.multi_reduction <add>, %83, %cst_66 [0] : vector<32x128xf32> to vector<128xf32>
    %85 = vector.shape_cast %84 : vector<128xf32> to vector<1x128xf32>
    %86 = tpu.concatenate %82, %85 in 0 : vector<1x128xf32>, vector<1x128xf32> -> vector<2x128xf32>
    %cst_67 = arith.constant dense<0.000000e+00> : vector<2x128xf32>
    %87 = tpu.matmul %86, %0, %cst_67 {dimension_numbers = #tpu.dot_dimension_numbers<[1], [0], [0], [1], [0, 0, 1, 1], [], []>} : vector<2x128xf32>, vector<128x128xf32>, vector<2x128xf32> -> vector<2x128xf32>
    %88 = vector.extract_strided_slice %87 {offsets = [0, 0], sizes = [1, 128], strides = [1, 1]} : vector<2x128xf32> to vector<1x128xf32>
    %cst_68 = arith.constant 0.001953125 : f32
    %89 = vector.broadcast %cst_68 : f32 to vector<1x128xf32>
    %90 = arith.mulf %88, %89 : vector<1x128xf32>
    %91 = vector.extract_strided_slice %87 {offsets = [1, 0], sizes = [1, 128], strides = [1, 1]} : vector<2x128xf32> to vector<1x128xf32>
    %cst_69 = arith.constant 0.001953125 : f32
    %92 = vector.broadcast %cst_69 : f32 to vector<1x128xf32>
    %93 = arith.mulf %91, %92 : vector<1x128xf32>
    %94 = arith.mulf %90, %90 : vector<1x128xf32>
    %95 = arith.subf %93, %94 : vector<1x128xf32>
    %cst_70 = arith.constant 9.99999974E-6 : f32
    %96 = vector.broadcast %cst_70 : f32 to vector<1x128xf32>
    %97 = arith.addf %95, %96 : vector<1x128xf32>
    %98 = math.rsqrt %97 : vector<1x128xf32>
    %99 = arith.mulf %3, %98 : vector<1x128xf32>
    %100 = vector.broadcast %90 : vector<1x128xf32> to vector<32x128xf32>
    %101 = arith.subf %80, %100 : vector<32x128xf32>
    %102 = vector.broadcast %99 : vector<1x128xf32> to vector<32x128xf32>
    %103 = arith.mulf %101, %102 : vector<32x128xf32>
    %104 = vector.broadcast %4 : vector<1x128xf32> to vector<32x128xf32>
    %105 = arith.addf %103, %104 : vector<32x128xf32>
    %cst_71 = arith.constant 0.000000e+00 : f32
    %106 = vector.broadcast %cst_71 : f32 to vector<32x128xf32>
    %107 = arith.maximumf %105, %106 : vector<32x128xf32>
    %c0_72 = arith.constant 0 : index
    %c0_73 = arith.constant 0 : index
    %108 = vector.load %arg6[%c0_72, %c0_73] : memref<32x128xf32, #tpu.memory_space<vmem>>, vector<32x128xf32>
    tpu.vector_store %arg6[%c0_72, %c0_73], %107 {strides = array<i32>} : memref<32x128xf32, #tpu.memory_space<vmem>>, vector<32x128xf32>,
    return
  }
  func.func @transform_0(%arg0: i32) -> (i32, i32, i32) {
    %c0_i32 = arith.constant 0 : i32
    %c0_i32_0 = arith.constant 0 : i32
    %c0_i32_1 = arith.constant 0 : i32
    %c0_i32_2 = arith.constant 0 : i32
    return %c0_i32, %c0_i32_0, %c0_i32_1 : i32, i32, i32
  }
  func.func @transform_1(%arg0: i32) -> (i32, i32, i32) {
    %c0_i32 = arith.constant 0 : i32
    %c0_i32_0 = arith.constant 0 : i32
    %c0_i32_1 = arith.constant 0 : i32
    %c0_i32_2 = arith.constant 0 : i32
    return %c0_i32, %c0_i32_0, %c0_i32_1 : i32, i32, i32
  }
  func.func @transform_2(%arg0: i32) -> (i32, i32, i32) {
    %c0_i32 = arith.constant 0 : i32
    %c0_i32_0 = arith.constant 0 : i32
    %c0_i32_1 = arith.constant 0 : i32
    %c0_i32_2 = arith.constant 0 : i32
    return %c0_i32, %c0_i32_0, %c0_i32_1 : i32, i32, i32
  }
  func.func @transform_3(%arg0: i32) -> (i32, i32) {
    %c0_i32 = arith.constant 0 : i32
    %c0_i32_0 = arith.constant 0 : i32
    %c0_i32_1 = arith.constant 0 : i32
    return %c0_i32, %c0_i32_0 : i32, i32
  }
  func.func @transform_4(%arg0: i32) -> (i32, i32) {
    %c0_i32 = arith.constant 0 : i32
    %c0_i32_0 = arith.constant 0 : i32
    %c0_i32_1 = arith.constant 0 : i32
    return %c0_i32, %c0_i32_0 : i32, i32
  }
  func.func @transform_5(%arg0: i32) -> (i32, i32) {
    %c0_i32 = arith.constant 0 : i32
    %c0_i32_0 = arith.constant 0 : i32
    %c0_i32_1 = arith.constant 0 : i32
    return %c0_i32, %c0_i32_0 : i32, i32
  }
}

</mosaic_0001>

<llo_original>
// kernel: _double_conv_fwd.1
$region0: #{_double_conv_fwd.1}
  #allocation0 [shape = 'u32[]', space=smem, size = 0x4, offset = 0x4, fixed_abs, tag = 'smem constant byte address 0x4 - core index']
  #allocation1 [shape = 'u32[72,128]{1,0:T(1,128)}', space=vmem, size = 0x9000, scoped, tag = 'internal scratch']
  #allocation2 [shape = 'f32[2,18,128]{2,1,0:T(8,128)}', space=vmem, size = 0x6000, scoped, tag = 'scratch operand']
  %s0 = inlined_call_operand.vmem [shape: f32[2,18,64], index: 0, kind: input, shape index: {}]
  %s1 = inlined_call_operand.vmem [shape: bf16[3,64,128], index: 1, kind: input, shape index: {}]
  %s2 = inlined_call_operand.vmem [shape: bf16[3,128,128], index: 2, kind: input, shape index: {}]
  %s3 = inlined_call_operand.vmem [shape: f32[8,128], index: 3, kind: input, shape index: {}]
  %s4 = inlined_call_operand.vmem [shape: f32[128,128], index: 4, kind: input, shape index: {}]
  %s5 = inlined_call_operand.vmem [shape: f32[32,128], index: 5, kind: output, shape index: {}]
  %s6 = sld [smem:[#allocation0]]
  $region30: #{_double_conv_fwd.1} parent=0
    _
  %s8 = ssub.s32 1, %s6
  %s9 = scalar_select 0, %s8, %s6
  // Predicated region
  $region2: #{_double_conv_fwd.1} parent=0 // pred_check
    _
  $region3: #{_double_conv_fwd.1} parent=0 // pred_check_branch
    %11 = sbr.rel (0) target = $region5
  $region4: #{_double_conv_fwd.1} parent=0 // pred_region
    _
  $region5: #{_double_conv_fwd.1} parent=0 // pred_fallthru
    _
  // Predicated region
  $region6: #{_double_conv_fwd.1} parent=0 // pred_check
    _
  $region7: #{_double_conv_fwd.1} parent=0 // pred_check_branch
    %13 = sbr.rel (0) target = $region9
  $region8: #{_double_conv_fwd.1} parent=0 // pred_region
    _
  $region9: #{_double_conv_fwd.1} parent=0 // pred_fallthru
    _
  // Predicated region
  $region10: #{_double_conv_fwd.1} parent=0 // pred_check
    _
  $region11: #{_double_conv_fwd.1} parent=0 // pred_check_branch
    %15 = sbr.rel (0) target = $region13
  $region12: #{_double_conv_fwd.1} parent=0 // pred_region
    _
  $region13: #{_double_conv_fwd.1} parent=0 // pred_fallthru
    _
  // Predicated region
  $region14: #{_double_conv_fwd.1} parent=0 // pred_check
    _
  $region15: #{_double_conv_fwd.1} parent=0 // pred_check_branch
    %17 = sbr.rel (0) target = $region17
  $region16: #{_double_conv_fwd.1} parent=0 // pred_region
    _
  $region17: #{_double_conv_fwd.1} parent=0 // pred_fallthru
    _
  // Predicated region
  $region18: #{_double_conv_fwd.1} parent=0 // pred_check
    _
  $region19: #{_double_conv_fwd.1} parent=0 // pred_check_branch
    %19 = sbr.rel (0) target = $region21
  $region20: #{_double_conv_fwd.1} parent=0 // pred_region
    _
  $region21: #{_double_conv_fwd.1} parent=0 // pred_fallthru
    _
  %v21 = vld [vmem:[%s4] sm:$0xff]
  %v22 = vld [vmem:[%s4 + $0x8] sm:$0xff]
  %v23 = vld [vmem:[%s4 + $0x10] sm:$0xff]
  %v24 = vld [vmem:[%s4 + $0x18] sm:$0xff]
  %v25 = vld [vmem:[%s4 + $0x20] sm:$0xff]
  %v26 = vld [vmem:[%s4 + $0x28] sm:$0xff]
  %v27 = vld [vmem:[%s4 + $0x30] sm:$0xff]
  %v28 = vld [vmem:[%s4 + $0x38] sm:$0xff]
  %v29 = vld [vmem:[%s4 + $0x40] sm:$0xff]
  %v30 = vld [vmem:[%s4 + $0x48] sm:$0xff]
  %v31 = vld [vmem:[%s4 + $0x50] sm:$0xff]
  %v32 = vld [vmem:[%s4 + $0x58] sm:$0xff]
  %v33 = vld [vmem:[%s4 + $0x60] sm:$0xff]
  %v34 = vld [vmem:[%s4 + $0x68] sm:$0xff]
  %v35 = vld [vmem:[%s4 + $0x70] sm:$0xff]
  %v36 = vld [vmem:[%s4 + $0x78] sm:$0xff]
  %v37 = vld [vmem:[%s3] sm:$0x1]
  %v38 = vld [vmem:[%s3 + $0x1] sm:$0x1]
  %v39 = vld [vmem:[%s3 + $0x2] sm:$0x1]
  %v40 = vld [vmem:[%s3 + $0x3] sm:$0x1]
  %v41 = vld [vmem:[%s0] sm:$0xff]
  %v42 = vld [vmem:[%s0 + $0x8] sm:$0xff]
  %v43 = vld [vmem:[%s0 + $0x18] sm:$0xff]
  %v44 = vld [vmem:[%s0 + $0x20] sm:$0xff]
  %v45 = vpack.c.bf16 %v42, %v41
  %v46 = vpack.c.bf16 %v44, %v43
  %v47 = vld [vmem:[%s1] sm:$0xf]
  %v48 = vld [vmem:[%s1 + $0x4] sm:$0xf]
  %v49 = vld [vmem:[%s1 + $0x8] sm:$0xf]
  %v50 = vld [vmem:[%s1 + $0xc] sm:$0xf]
  %v51 = vld [vmem:[%s1 + $0x10] sm:$0xf]
  %v52 = vld [vmem:[%s1 + $0x14] sm:$0xf]
  %v53 = vld [vmem:[%s1 + $0x18] sm:$0xf]
  %v54 = vld [vmem:[%s1 + $0x1c] sm:$0xf]
  %v55 = vld [vmem:[%s0 + $0x1] sm:$0xff]
  %v56 = vld [vmem:[%s0 + $0x9] sm:$0xff]
  %v57 = vld [vmem:[%s0 + $0x19] sm:$0xff]
  %v58 = vld [vmem:[%s0 + $0x21] sm:$0xff]
  %v59 = vpack.c.bf16 %v56, %v55
  %v60 = vpack.c.bf16 %v58, %v57
  %s61 = scalar_lea.vmem %s1, 32
  %v62 = vld [vmem:[%s61] sm:$0xf]
  %v63 = vld [vmem:[%s61 + $0x4] sm:$0xf]
  %v64 = vld [vmem:[%s61 + $0x8] sm:$0xf]
  %v65 = vld [vmem:[%s61 + $0xc] sm:$0xf]
  %v66 = vld [vmem:[%s61 + $0x10] sm:$0xf]
  %v67 = vld [vmem:[%s61 + $0x14] sm:$0xf]
  %v68 = vld [vmem:[%s61 + $0x18] sm:$0xf]
  %v69 = vld [vmem:[%s61 + $0x1c] sm:$0xf]
  %v78 = vunpack.c.l.b16 %v62
  %v79 = vunpack.c.l.b16 %v63
  %v80 = vunpack.c.l.b16 %v64
  %v81 = vunpack.c.l.b16 %v65
  %v82 = vunpack.c.l.b16 %v66
  %v83 = vunpack.c.l.b16 %v67
  %v84 = vunpack.c.l.b16 %v68
  %v85 = vunpack.c.l.b16 %v69
  %v86 = vpack.c.b16 %v79, %v78
  %v87 = vpack.c.b16 %v81, %v80
  %v88 = vpack.c.b16 %v83, %v82
  %v89 = vpack.c.b16 %v85, %v84
  %vm94 = vcmask 523264
  %v96 = vsel %vm94, %v59, 0
  %v99 = vsel %vm94, %v60, 0
  %101 = vmatpush.bf16.msra.mxu0 0
  %102 = vmatpush.bf16.msra.mxu0 0
  %103 = vmatpush.bf16.msra.mxu0 0
  %104 = vmatpush.bf16.msra.mxu0 0
  %105 = vmatpush.bf16.msra.mxu0 %v89
  %106 = vmatpush.bf16.msra.mxu0 %v88
  %107 = vmatpush.bf16.msra.mxu0 %v87
  %108 = vmatpush.bf16.msra.mxu0 %v86
  %109 = vmatmul.bf16.gmra.mxu0 %v96
  %v110 = vpop.f32.mrf.mxu0
  %v111 = vadd.f32 0.0, %v110
  %v112 = vpop.f32.mrf.mxu0
  %v113 = vadd.f32 0.0, %v112
  %114 = vmatmul.bf16.gmra.mxu0 %v99
  %v115 = vpop.f32.mrf.mxu0
  %v116 = vadd.f32 0.0, %v115
  %v117 = vpop.f32.mrf.mxu0
  %v118 = vadd.f32 0.0, %v117
  %119 = vdwg.mxu0
  %v128 = vunpack.c.l.b16 %v47
  %v129 = vunpack.c.l.b16 %v48
  %v130 = vunpack.c.l.b16 %v49
  %v131 = vunpack.c.l.b16 %v50
  %v132 = vunpack.c.l.b16 %v51
  %v133 = vunpack.c.l.b16 %v52
  %v134 = vunpack.c.l.b16 %v53
  %v135 = vunpack.c.l.b16 %v54
  %v136 = vpack.c.b16 %v129, %v128
  %v137 = vpack.c.b16 %v131, %v130
  %v138 = vpack.c.b16 %v133, %v132
  %v139 = vpack.c.b16 %v135, %v134
  %v145 = vsel %vm94, %v45, 0
  %v148 = vsel %vm94, %v46, 0
  %150 = vmatpush.bf16.msra.mxu0 0
  %151 = vmatpush.bf16.msra.mxu0 0
  %152 = vmatpush.bf16.msra.mxu0 0
  %153 = vmatpush.bf16.msra.mxu0 0
  %154 = vmatpush.bf16.msra.mxu0 %v139
  %155 = vmatpush.bf16.msra.mxu0 %v138
  %156 = vmatpush.bf16.msra.mxu0 %v137
  %157 = vmatpush.bf16.msra.mxu0 %v136
  %158 = vmatmul.bf16.gmra.mxu0 %v145
  %v159 = vpop.f32.mrf.mxu0
  %v160 = vadd.f32 %v111, %v159
  %v161 = vpop.f32.mrf.mxu0
  %v162 = vadd.f32 %v113, %v161
  %163 = vmatmul.bf16.gmra.mxu0 %v148
  %v164 = vpop.f32.mrf.mxu0
  %v165 = vadd.f32 %v116, %v164
  %v166 = vpop.f32.mrf.mxu0
  %v167 = vadd.f32 %v118, %v166
  %168 = vdwg.mxu0
  %v169 = vld [vmem:[%s0 + $0x2] sm:$0xff]
  %v170 = vld [vmem:[%s0 + $0xa] sm:$0xff]
  %v171 = vld [vmem:[%s0 + $0x1a] sm:$0xff]
  %v172 = vld [vmem:[%s0 + $0x22] sm:$0xff]
  %v173 = vpack.c.bf16 %v170, %v169
  %v174 = vpack.c.bf16 %v172, %v171
  %s175 = scalar_lea.vmem %s1, 64
  %v176 = vld [vmem:[%s175] sm:$0xf]
  %v177 = vld [vmem:[%s175 + $0x4] sm:$0xf]
  %v178 = vld [vmem:[%s175 + $0x8] sm:$0xf]
  %v179 = vld [vmem:[%s175 + $0xc] sm:$0xf]
  %v180 = vld [vmem:[%s175 + $0x10] sm:$0xf]
  %v181 = vld [vmem:[%s175 + $0x14] sm:$0xf]
  %v182 = vld [vmem:[%s175 + $0x18] sm:$0xf]
  %v183 = vld [vmem:[%s175 + $0x1c] sm:$0xf]
  %v192 = vunpack.c.l.b16 %v176
  %v193 = vunpack.c.l.b16 %v177
  %v194 = vunpack.c.l.b16 %v178
  %v195 = vunpack.c.l.b16 %v179
  %v196 = vunpack.c.l.b16 %v180
  %v197 = vunpack.c.l.b16 %v181
  %v198 = vunpack.c.l.b16 %v182
  %v199 = vunpack.c.l.b16 %v183
  %v200 = vpack.c.b16 %v193, %v192
  %v201 = vpack.c.b16 %v195, %v194
  %v202 = vpack.c.b16 %v197, %v196
  %v203 = vpack.c.b16 %v199, %v198
  %v209 = vsel %vm94, %v173, 0
  %v212 = vsel %vm94, %v174, 0
  %214 = vmatpush.bf16.msra.mxu0 0
  %215 = vmatpush.bf16.msra.mxu0 0
  %216 = vmatpush.bf16.msra.mxu0 0
  %217 = vmatpush.bf16.msra.mxu0 0
  %218 = vmatpush.bf16.msra.mxu0 %v203
  %219 = vmatpush.bf16.msra.mxu0 %v202
  %220 = vmatpush.bf16.msra.mxu0 %v201
  %221 = vmatpush.bf16.msra.mxu0 %v200
  %222 = vmatmul.bf16.gmra.mxu0 %v209
  %v223 = vpop.f32.mrf.mxu0
  %v224 = vadd.f32 0.0, %v223
  %v225 = vpop.f32.mrf.mxu0
  %v226 = vadd.f32 0.0, %v225
  %227 = vmatmul.bf16.gmra.mxu0 %v212
  %v228 = vpop.f32.mrf.mxu0
  %v229 = vadd.f32 0.0, %v228
  %v230 = vpop.f32.mrf.mxu0
  %v231 = vadd.f32 0.0, %v230
  %232 = vdwg.mxu0
  %v233 = vadd.f32 %v160, %v224
  %v234 = vadd.f32 %v162, %v226
  %v235 = vadd.f32 %v165, %v229
  %v236 = vadd.f32 %v167, %v231
  %v237 = vadd.f32 %v233, %v234
  %v238 = vadd.f32 %v237, %v235
  %v239 = vadd.f32 %v238, %v236
  %v240 = vrot.slane %v239, 4
  %v241 = vadd.f32 %v239, %v240
  %v242 = vrot.slane %v241, 2
  %v243 = vadd.f32 %v241, %v242
  %v244 = vrot.slane %v243, 1
  %v245 = vadd.f32 %v243, %v244
  %v246 = vmul.f32 %v233, %v233
  %v247 = vmul.f32 %v234, %v234
  %v248 = vmul.f32 %v235, %v235
  %v249 = vmul.f32 %v236, %v236
  %v250 = vadd.f32 %v246, %v247
  %v251 = vadd.f32 %v250, %v248
  %v252 = vadd.f32 %v251, %v249
  %v253 = vrot.slane %v252, 4
  %v254 = vadd.f32 %v252, %v253
  %v255 = vrot.slane %v254, 2
  %v256 = vadd.f32 %v254, %v255
  %v257 = vrot.slane %v256, 1
  %v258 = vadd.f32 %v256, %v257
  %vm259 = vcmask 1040384
  %v260 = vsel %vm259, %v245, %v258
  %261 = vmatpush.msra.mxu0 %v36
  %262 = vmatpush.msra.mxu0 %v35
  %263 = vmatpush.msra.mxu0 %v34
  %264 = vmatpush.msra.mxu0 %v33
  %265 = vmatpush.msra.mxu0 %v32
  %266 = vmatpush.msra.mxu0 %v31
  %267 = vmatpush.msra.mxu0 %v30
  %268 = vmatpush.msra.mxu0 %v29
  %269 = vmatpush.msra.mxu0 %v28
  %270 = vmatpush.msra.mxu0 %v27
  %271 = vmatpush.msra.mxu0 %v26
  %272 = vmatpush.msra.mxu0 %v25
  %273 = vmatpush.msra.mxu0 %v24
  %274 = vmatpush.msra.mxu0 %v23
  %275 = vmatpush.msra.mxu0 %v22
  %276 = vmatpush.msra.mxu0 %v21
  %277 = vmatmul.f32.gmra.mxu0 %v260
  %v278 = vpop.f32.mrf.mxu0
  %v279 = vadd.f32 0.0, %v278
  %280 = vdwg.mxu0
  %v281 = vmul.f32 %v279, 0.001953125
  %v282 = vmul.f32 %v281, %v281
  %v284 = vrot.slane %v282, 7
  %v286 = vsub.f32 %v281, %v284
  %v287 = vadd.f32 %v286, 1e-05
  %v288 = vrsqrt.pop %v287
  %v289 = vmul.f32 %v288, %v287
  %v290 = vmul.f32 %v289, %v288
  %v291 = vmul.f32 0.5, %v290
  %v292 = vsub.f32 1.5, %v291
  %v293 = vmul.f32 %v288, %v292
  %vm294 = vweird.f32 %v287
  %vm295 = vweird.f32 %v288
  %vm296 = vmor %vm294, %vm295
  %v297 = vsel %vm296, %v288, %v293
  %v299 = vrot.slane %v297, 1
  %v301 = vmul.f32 %v37, %v299
  %v302 = vperm.slane %v281, 0
  %v303 = vsub.f32 %v233, %v302
  %v304 = vsub.f32 %v234, %v302
  %v305 = vsub.f32 %v235, %v302
  %v306 = vsub.f32 %v236, %v302
  %v307 = vperm.slane %v301, 0
  %v308 = vmul.f32 %v303, %v307
  %v309 = vmul.f32 %v304, %v307
  %v310 = vmul.f32 %v305, %v307
  %v311 = vmul.f32 %v306, %v307
  %v312 = vperm.slane %v38, 0
  %v313 = vadd.f32 %v308, %v312
  %v314 = vadd.f32 %v309, %v312
  %v315 = vadd.f32 %v310, %v312
  %v316 = vadd.f32 %v311, %v312
  %v317 = vmax.f32 %v313, 0.0
  %v318 = vmax.f32 %v314, 0.0
  %v319 = vmax.f32 %v315, 0.0
  %v320 = vmax.f32 %v316, 0.0
  %321 = vst [vmem:[#allocation2] sm:$0x1] 0.0
  %322 = vst [vmem:[#allocation2 + $0x18] sm:$0x1] 0.0
  %323 = vst [vmem:[#allocation2 + $0x11] sm:$0x1] 0.0
  %324 = vst [vmem:[#allocation2 + $0x29] sm:$0x1] 0.0
  %325 = vst [vmem:[#allocation2 + $0x1] sm:$0xff] %v317
  %326 = vst [vmem:[#allocation2 + $0x9] sm:$0xff] %v318
  %327 = vst [vmem:[#allocation2 + $0x19] sm:$0xff] %v319
  %328 = vst [vmem:[#allocation2 + $0x21] sm:$0xff] %v320
  %v329 = vld [vmem:[#allocation2] sm:$0xff]
  %v330 = vld [vmem:[#allocation2 + $0x8] sm:$0xff]
  %v331 = vld [vmem:[#allocation2 + $0x18] sm:$0xff]
  %v332 = vld [vmem:[#allocation2 + $0x20] sm:$0xff]
  %v333 = vpack.c.bf16 %v330, %v329
  %v334 = vpack.c.bf16 %v332, %v331
  %v335 = vld [vmem:[%s2] sm:$0xf]
  %v336 = vld [vmem:[%s2 + $0x4] sm:$0xf]
  %v337 = vld [vmem:[%s2 + $0x8] sm:$0xf]
  %v338 = vld [vmem:[%s2 + $0xc] sm:$0xf]
  %v339 = vld [vmem:[%s2 + $0x10] sm:$0xf]
  %v340 = vld [vmem:[%s2 + $0x14] sm:$0xf]
  %v341 = vld [vmem:[%s2 + $0x18] sm:$0xf]
  %v342 = vld [vmem:[%s2 + $0x1c] sm:$0xf]
  %v343 = vld [vmem:[%s2 + $0x20] sm:$0xf]
  %v344 = vld [vmem:[%s2 + $0x24] sm:$0xf]
  %v345 = vld [vmem:[%s2 + $0x28] sm:$0xf]
  %v346 = vld [vmem:[%s2 + $0x2c] sm:$0xf]
  %v347 = vld [vmem:[%s2 + $0x30] sm:$0xf]
  %v348 = vld [vmem:[%s2 + $0x34] sm:$0xf]
  %v349 = vld [vmem:[%s2 + $0x38] sm:$0xf]
  %v350 = vld [vmem:[%s2 + $0x3c] sm:$0xf]
  %v351 = vld [vmem:[#allocation2 + $0x1] sm:$0xff]
  %v352 = vld [vmem:[#allocation2 + $0x9] sm:$0xff]
  %v353 = vld [vmem:[#allocation2 + $0x19] sm:$0xff]
  %v354 = vld [vmem:[#allocation2 + $0x21] sm:$0xff]
  %v355 = vpack.c.bf16 %v352, %v351
  %v356 = vpack.c.bf16 %v354, %v353
  %s357 = scalar_lea.vmem %s2, 64
  %v358 = vld [vmem:[%s357] sm:$0xf]
  %v359 = vld [vmem:[%s357 + $0x4] sm:$0xf]
  %v360 = vld [vmem:[%s357 + $0x8] sm:$0xf]
  %v361 = vld [vmem:[%s357 + $0xc] sm:$0xf]
  %v362 = vld [vmem:[%s357 + $0x10] sm:$0xf]
  %v363 = vld [vmem:[%s357 + $0x14] sm:$0xf]
  %v364 = vld [vmem:[%s357 + $0x18] sm:$0xf]
  %v365 = vld [vmem:[%s357 + $0x1c] sm:$0xf]
  %v366 = vld [vmem:[%s357 + $0x20] sm:$0xf]
  %v367 = vld [vmem:[%s357 + $0x24] sm:$0xf]
  %v368 = vld [vmem:[%s357 + $0x28] sm:$0xf]
  %v369 = vld [vmem:[%s357 + $0x2c] sm:$0xf]
  %v370 = vld [vmem:[%s357 + $0x30] sm:$0xf]
  %v371 = vld [vmem:[%s357 + $0x34] sm:$0xf]
  %v372 = vld [vmem:[%s357 + $0x38] sm:$0xf]
  %v373 = vld [vmem:[%s357 + $0x3c] sm:$0xf]
  %v390 = vunpack.c.l.b16 %v358
  %v391 = vunpack.c.l.b16 %v359
  %v392 = vunpack.c.l.b16 %v360
  %v393 = vunpack.c.l.b16 %v361
  %v394 = vunpack.c.l.b16 %v362
  %v395 = vunpack.c.l.b16 %v363
  %v396 = vunpack.c.l.b16 %v364
  %v397 = vunpack.c.l.b16 %v365
  %v398 = vunpack.c.l.b16 %v366
  %v399 = vunpack.c.l.b16 %v367
  %v400 = vunpack.c.l.b16 %v368
  %v401 = vunpack.c.l.b16 %v369
  %v402 = vunpack.c.l.b16 %v370
  %v403 = vunpack.c.l.b16 %v371
  %v404 = vunpack.c.l.b16 %v372
  %v405 = vunpack.c.l.b16 %v373
  %v406 = vpack.c.b16 %v391, %v390
  %v407 = vpack.c.b16 %v393, %v392
  %v408 = vpack.c.b16 %v395, %v394
  %v409 = vpack.c.b16 %v397, %v396
  %v410 = vpack.c.b16 %v399, %v398
  %v411 = vpack.c.b16 %v401, %v400
  %v412 = vpack.c.b16 %v403, %v402
  %v413 = vpack.c.b16 %v405, %v404
  %422 = vmatpush.bf16.msra.mxu0 %v413
  %423 = vmatpush.bf16.msra.mxu0 %v412
  %424 = vmatpush.bf16.msra.mxu0 %v411
  %425 = vmatpush.bf16.msra.mxu0 %v410
  %426 = vmatpush.bf16.msra.mxu0 %v409
  %427 = vmatpush.bf16.msra.mxu0 %v408
  %428 = vmatpush.bf16.msra.mxu0 %v407
  %429 = vmatpush.bf16.msra.mxu0 %v406
  %430 = vmatmul.bf16.gmra.mxu0 %v355
  %v431 = vpop.f32.mrf.mxu0
  %v432 = vadd.f32 0.0, %v431
  %v433 = vpop.f32.mrf.mxu0
  %v434 = vadd.f32 0.0, %v433
  %435 = vmatmul.bf16.gmra.mxu0 %v356
  %v436 = vpop.f32.mrf.mxu0
  %v437 = vadd.f32 0.0, %v436
  %v438 = vpop.f32.mrf.mxu0
  %v439 = vadd.f32 0.0, %v438
  %440 = vdwg.mxu0
  %v457 = vunpack.c.l.b16 %v335
  %v458 = vunpack.c.l.b16 %v336
  %v459 = vunpack.c.l.b16 %v337
  %v460 = vunpack.c.l.b16 %v338
  %v461 = vunpack.c.l.b16 %v339
  %v462 = vunpack.c.l.b16 %v340
  %v463 = vunpack.c.l.b16 %v341
  %v464 = vunpack.c.l.b16 %v342
  %v465 = vunpack.c.l.b16 %v343
  %v466 = vunpack.c.l.b16 %v344
  %v467 = vunpack.c.l.b16 %v345
  %v468 = vunpack.c.l.b16 %v346
  %v469 = vunpack.c.l.b16 %v347
  %v470 = vunpack.c.l.b16 %v348
  %v471 = vunpack.c.l.b16 %v349
  %v472 = vunpack.c.l.b16 %v350
  %v473 = vpack.c.b16 %v458, %v457
  %v474 = vpack.c.b16 %v460, %v459
  %v475 = vpack.c.b16 %v462, %v461
  %v476 = vpack.c.b16 %v464, %v463
  %v477 = vpack.c.b16 %v466, %v465
  %v478 = vpack.c.b16 %v468, %v467
  %v479 = vpack.c.b16 %v470, %v469
  %v480 = vpack.c.b16 %v472, %v471
  %489 = vmatpush.bf16.msra.mxu0 %v480
  %490 = vmatpush.bf16.msra.mxu0 %v479
  %491 = vmatpush.bf16.msra.mxu0 %v478
  %492 = vmatpush.bf16.msra.mxu0 %v477
  %493 = vmatpush.bf16.msra.mxu0 %v476
  %494 = vmatpush.bf16.msra.mxu0 %v475
  %495 = vmatpush.bf16.msra.mxu0 %v474
  %496 = vmatpush.bf16.msra.mxu0 %v473
  %497 = vmatmul.bf16.gmra.mxu0 %v333
  %v498 = vpop.f32.mrf.mxu0
  %v499 = vadd.f32 %v432, %v498
  %v500 = vpop.f32.mrf.mxu0
  %v501 = vadd.f32 %v434, %v500
  %502 = vmatmul.bf16.gmra.mxu0 %v334
  %v503 = vpop.f32.mrf.mxu0
  %v504 = vadd.f32 %v437, %v503
  %v505 = vpop.f32.mrf.mxu0
  %v506 = vadd.f32 %v439, %v505
  %507 = vdwg.mxu0
  %v508 = vld [vmem:[#allocation2 + $0x2] sm:$0xff]
  %v509 = vld [vmem:[#allocation2 + $0xa] sm:$0xff]
  %v510 = vld [vmem:[#allocation2 + $0x1a] sm:$0xff]
  %v511 = vld [vmem:[#allocation2 + $0x22] sm:$0xff]
  %v512 = vpack.c.bf16 %v509, %v508
  %v513 = vpack.c.bf16 %v511, %v510
  %s514 = scalar_lea.vmem %s2, 128
  %v515 = vld [vmem:[%s514] sm:$0xf]
  %v516 = vld [vmem:[%s514 + $0x4] sm:$0xf]
  %v517 = vld [vmem:[%s514 + $0x8] sm:$0xf]
  %v518 = vld [vmem:[%s514 + $0xc] sm:$0xf]
  %v519 = vld [vmem:[%s514 + $0x10] sm:$0xf]
  %v520 = vld [vmem:[%s514 + $0x14] sm:$0xf]
  %v521 = vld [vmem:[%s514 + $0x18] sm:$0xf]
  %v522 = vld [vmem:[%s514 + $0x1c] sm:$0xf]
  %v523 = vld [vmem:[%s514 + $0x20] sm:$0xf]
  %v524 = vld [vmem:[%s514 + $0x24] sm:$0xf]
  %v525 = vld [vmem:[%s514 + $0x28] sm:$0xf]
  %v526 = vld [vmem:[%s514 + $0x2c] sm:$0xf]
  %v527 = vld [vmem:[%s514 + $0x30] sm:$0xf]
  %v528 = vld [vmem:[%s514 + $0x34] sm:$0xf]
  %v529 = vld [vmem:[%s514 + $0x38] sm:$0xf]
  %v530 = vld [vmem:[%s514 + $0x3c] sm:$0xf]
  %v547 = vunpack.c.l.b16 %v515
  %v548 = vunpack.c.l.b16 %v516
  %v549 = vunpack.c.l.b16 %v517
  %v550 = vunpack.c.l.b16 %v518
  %v551 = vunpack.c.l.b16 %v519
  %v552 = vunpack.c.l.b16 %v520
  %v553 = vunpack.c.l.b16 %v521
  %v554 = vunpack.c.l.b16 %v522
  %v555 = vunpack.c.l.b16 %v523
  %v556 = vunpack.c.l.b16 %v524
  %v557 = vunpack.c.l.b16 %v525
  %v558 = vunpack.c.l.b16 %v526
  %v559 = vunpack.c.l.b16 %v527
  %v560 = vunpack.c.l.b16 %v528
  %v561 = vunpack.c.l.b16 %v529
  %v562 = vunpack.c.l.b16 %v530
  %v563 = vpack.c.b16 %v548, %v547
  %v564 = vpack.c.b16 %v550, %v549
  %v565 = vpack.c.b16 %v552, %v551
  %v566 = vpack.c.b16 %v554, %v553
  %v567 = vpack.c.b16 %v556, %v555
  %v568 = vpack.c.b16 %v558, %v557
  %v569 = vpack.c.b16 %v560, %v559
  %v570 = vpack.c.b16 %v562, %v561
  %579 = vmatpush.bf16.msra.mxu0 %v570
  %580 = vmatpush.bf16.msra.mxu0 %v569
  %581 = vmatpush.bf16.msra.mxu0 %v568
  %582 = vmatpush.bf16.msra.mxu0 %v567
  %583 = vmatpush.bf16.msra.mxu0 %v566
  %584 = vmatpush.bf16.msra.mxu0 %v565
  %585 = vmatpush.bf16.msra.mxu0 %v564
  %586 = vmatpush.bf16.msra.mxu0 %v563
  %587 = vmatmul.bf16.gmra.mxu0 %v512
  %v588 = vpop.f32.mrf.mxu0
  %v589 = vadd.f32 0.0, %v588
  %v590 = vpop.f32.mrf.mxu0
  %v591 = vadd.f32 0.0, %v590
  %592 = vmatmul.bf16.gmra.mxu0 %v513
  %v593 = vpop.f32.mrf.mxu0
  %v594 = vadd.f32 0.0, %v593
  %v595 = vpop.f32.mrf.mxu0
  %v596 = vadd.f32 0.0, %v595
  %597 = vdwg.mxu0
  %v598 = vadd.f32 %v499, %v589
  %v599 = vadd.f32 %v501, %v591
  %v600 = vadd.f32 %v504, %v594
  %v601 = vadd.f32 %v506, %v596
  %v602 = vadd.f32 %v598, %v599
  %v603 = vadd.f32 %v602, %v600
  %v604 = vadd.f32 %v603, %v601
  %v605 = vrot.slane %v604, 4
  %v606 = vadd.f32 %v604, %v605
  %v607 = vrot.slane %v606, 2
  %v608 = vadd.f32 %v606, %v607
  %v609 = vrot.slane %v608, 1
  %v610 = vadd.f32 %v608, %v609
  %v611 = vmul.f32 %v598, %v598
  %v612 = vmul.f32 %v599, %v599
  %v613 = vmul.f32 %v600, %v600
  %v614 = vmul.f32 %v601, %v601
  %v615 = vadd.f32 %v611, %v612
  %v616 = vadd.f32 %v615, %v613
  %v617 = vadd.f32 %v616, %v614
  %v618 = vrot.slane %v617, 4
  %v619 = vadd.f32 %v617, %v618
  %v620 = vrot.slane %v619, 2
  %v621 = vadd.f32 %v619, %v620
  %v622 = vrot.slane %v621, 1
  %v623 = vadd.f32 %v621, %v622
  %v624 = vsel %vm259, %v610, %v623
  %625 = vmatpush.msra.mxu0 %v36
  %626 = vmatpush.msra.mxu0 %v35
  %627 = vmatpush.msra.mxu0 %v34
  %628 = vmatpush.msra.mxu0 %v33
  %629 = vmatpush.msra.mxu0 %v32
  %630 = vmatpush.msra.mxu0 %v31
  %631 = vmatpush.msra.mxu0 %v30
  %632 = vmatpush.msra.mxu0 %v29
  %633 = vmatpush.msra.mxu0 %v28
  %634 = vmatpush.msra.mxu0 %v27
  %635 = vmatpush.msra.mxu0 %v26
  %636 = vmatpush.msra.mxu0 %v25
  %637 = vmatpush.msra.mxu0 %v24
  %638 = vmatpush.msra.mxu0 %v23
  %639 = vmatpush.msra.mxu0 %v22
  %640 = vmatpush.msra.mxu0 %v21
  %641 = vmatmul.f32.gmra.mxu0 %v624
  %v642 = vpop.f32.mrf.mxu0
  %v643 = vadd.f32 0.0, %v642
  %644 = vdwg.mxu0
  %v645 = vmul.f32 %v643, 0.001953125
  %v646 = vmul.f32 %v645, %v645
  %v648 = vrot.slane %v646, 7
  %v650 = vsub.f32 %v645, %v648
  %v651 = vadd.f32 %v650, 1e-05
  %v652 = vrsqrt.pop %v651
  %v653 = vmul.f32 %v652, %v651
  %v654 = vmul.f32 %v653, %v652
  %v655 = vmul.f32 0.5, %v654
  %v656 = vsub.f32 1.5, %v655
  %v657 = vmul.f32 %v652, %v656
  %vm658 = vweird.f32 %v651
  %vm659 = vweird.f32 %v652
  %vm660 = vmor %vm658, %vm659
  %v661 = vsel %vm660, %v652, %v657
  %v663 = vrot.slane %v661, 1
  %v665 = vmul.f32 %v39, %v663
  %v666 = vperm.slane %v645, 0
  %v667 = vsub.f32 %v598, %v666
  %v668 = vsub.f32 %v599, %v666
  %v669 = vsub.f32 %v600, %v666
  %v670 = vsub.f32 %v601, %v666
  %v671 = vperm.slane %v665, 0
  %v672 = vmul.f32 %v667, %v671
  %v673 = vmul.f32 %v668, %v671
  %v674 = vmul.f32 %v669, %v671
  %v675 = vmul.f32 %v670, %v671
  %v676 = vperm.slane %v40, 0
  %v677 = vadd.f32 %v672, %v676
  %v678 = vadd.f32 %v673, %v676
  %v679 = vadd.f32 %v674, %v676
  %v680 = vadd.f32 %v675, %v676
  %v681 = vmax.f32 %v677, 0.0
  %v682 = vmax.f32 %v678, 0.0
  %v683 = vmax.f32 %v679, 0.0
  %v684 = vmax.f32 %v680, 0.0
  %685 = vst [vmem:[%s5] sm:$0xff] %v681
  %686 = vst [vmem:[%s5 + $0x8] sm:$0xff] %v682
  %687 = vst [vmem:[%s5 + $0x10] sm:$0xff] %v683
  %688 = vst [vmem:[%s5 + $0x18] sm:$0xff] %v684
  // Predicated region
  $region22: #{_double_conv_fwd.1} parent=0 // pred_check
    _
  $region23: #{_double_conv_fwd.1} parent=0 // pred_check_branch
    %690 = sbr.rel (0) target = $region25
  $region24: #{_double_conv_fwd.1} parent=0 // pred_region
    _
  $region25: #{_double_conv_fwd.1} parent=0 // pred_fallthru
    _
  // Predicated region
  $region26: #{_double_conv_fwd.1} parent=0 // pred_check
    _
  $region27: #{_double_conv_fwd.1} parent=0 // pred_check_branch
    %692 = sbr.rel (0) target = $region29
  $region28: #{_double_conv_fwd.1} parent=0 // pred_region
    _
  $region29: #{_double_conv_fwd.1} parent=0 // pred_fallthru
    _

</llo_original>
